<compile_context>
chip_gen: v7x
topology: tpu7x:2x2x1
jax: 0.10.0
libtpu: 0.0.40
codegen_flags: <defaults>
</compile_context>

<pallas_src>
import functools

import jax
import jax.numpy as jnp
from jax.experimental import pallas as pl
from jax.experimental.pallas import tpu as pltpu


def _vmem_capacity_bytes():
    """Best-effort per-core VMEM capacity; conservative 64 MiB (v7x) fallback."""
    try:
        info = pltpu.get_tpu_info()
        for attr in ("vmem_capacity_bytes", "vmem_size_bytes", "vmem_bytes"):
            v = getattr(info, attr, None)
            if v:
                return int(v)
    except Exception:
        pass
    return 64 * 1024 * 1024


def _round_up(x, m):
    return -(-x // m) * m


def _dice_kernel(pred_ref, tgt_ref, num_ref, den_ref, *,
                 s_total, tile_s, nb_per, masked):
    # pred_ref / tgt_ref: (N, C, TS) native dtype in VMEM.
    # num_ref / den_ref : (1, N, C) f32 resident accumulators (one per half).
    s = pl.program_id(1)

    @pl.when(s == 0)
    def _init():
        num_ref[...] = jnp.zeros_like(num_ref)
        den_ref[...] = jnp.zeros_like(den_ref)

    # Single load + cast of each input tile.
    pred = pred_ref[...].astype(jnp.float32)   # (N, C, TS)
    tgt = tgt_ref[...].astype(jnp.float32)     # (N, C, TS)

    # Stable softmax over the channel (sublane) axis; exp computed once.
    mx = jnp.max(pred, axis=1, keepdims=True)          # (N, 1, TS)
    e = jnp.exp(pred - mx)                              # (N, C, TS)
    inv_denom = 1.0 / jnp.sum(e, axis=1, keepdims=True)  # exact divide
    p = e * inv_denom                                    # softmax probs

    if masked:
        # Edge / duplicated blocks: zero out-of-range lanes with a *select*
        # (garbage lanes may hold inf/NaN after exp; where() keeps them out).
        h = pl.program_id(0)
        col = ((h * nb_per + s) * tile_s
               + jax.lax.broadcasted_iota(jnp.int32, pred.shape, 2))
        valid = col < s_total
        p = jnp.where(valid, p, 0.0)
        tgt = jnp.where(valid, tgt, 0.0)

    num_ref[...] += jnp.sum(p * tgt, axis=2)[None]            # (1, N, C)
    den_ref[...] += jnp.sum(p * p + tgt * tgt, axis=2)[None]  # (1, N, C)


def dice_loss(predict, target, *, tile_s=None, smooth=1.0):
    """predict, target: (N, C, H, W) arrays (any float dtype). Scalar f32 loss."""
    assert predict.shape == target.shape, "predict & target shape do not match"
    N, C, H, W = predict.shape
    S = H * W
    pred3 = predict.reshape(N, C, S)   # native dtype; cast happens in-kernel
    tgt3 = target.reshape(N, C, S)

    pb = jnp.dtype(pred3.dtype).itemsize
    tb = jnp.dtype(tgt3.dtype).itemsize

    # Sublane padding of the (N, C, TS) blocks: C rounds up to 8 (f32),
    # 16 (bf16), 32 (int8/fp8).
    padc_p = _round_up(C, 8 * (4 // pb))
    padc_t = _round_up(C, 8 * (4 // tb))
    padc_f32 = _round_up(C, 8)

    vmem_cap = _vmem_capacity_bytes()

    # Per-lane-column VMEM cost (bytes): double-buffered inputs + an estimate
    # of the f32 whole-block intermediates Mosaic materializes.
    in_cost = 2 * N * (padc_p * pb + padc_t * tb)
    tmp_cost = 8 * N * padc_f32 * 4
    if tile_s is None:
        budget = int(0.55 * vmem_cap)
        tile_s = budget // (in_cost + tmp_cost)
    # Lane-align; avoid blocks wider than the array when S >= 128.
    tile_s = max(128, (tile_s // 128) * 128)
    if S >= 128:
        tile_s = max(128, min(tile_s, (S // 128) * 128))

    nb_total = pl.cdiv(S, tile_s)
    n_split = 2 if nb_total >= 2 else 1     # 2-way spatial split (v7x: 2 TCs)
    nb_per = pl.cdiv(nb_total, n_split)
    # Mask needed if the last block overhangs S or a half has a duplicated
    # (clamped) block because nb_total isn't divisible by n_split.
    masked = (n_split * nb_per * tile_s) != S

    vmem_limit = int(min(0.75 * vmem_cap,
                         max((in_cost + tmp_cost) * tile_s + (1 << 20),
                             32 * 1024 * 1024)))

    kernel = functools.partial(_dice_kernel, s_total=S, tile_s=tile_s,
                               nb_per=nb_per, masked=masked)

    def in_map(h, s):
        # Clamp so a duplicated tail block never indexes past the array; its
        # contribution is zeroed by the in-kernel validity mask.
        return (0, 0, jnp.minimum(h * nb_per + s, nb_total - 1))

    def out_map(h, s):
        return (h, 0, 0)   # resident accumulator per spatial half

    num_p, den_p = pl.pallas_call(
        kernel,
        grid=(n_split, nb_per),
        in_specs=[
            pl.BlockSpec((N, C, tile_s), in_map),
            pl.BlockSpec((N, C, tile_s), in_map),
        ],
        out_specs=[
            pl.BlockSpec((1, N, C), out_map),
            pl.BlockSpec((1, N, C), out_map),
        ],
        out_shape=[
            jax.ShapeDtypeStruct((n_split, N, C), jnp.float32),
            jax.ShapeDtypeStruct((n_split, N, C), jnp.float32),
        ],
        compiler_params=pltpu.CompilerParams(
            dimension_semantics=("parallel", "arbitrary"),
            vmem_limit_bytes=vmem_limit,
        ),
    )(pred3, tgt3)

    # Tiny finalize in JAX: combine the two halves, add smooth once, dice, means.
    num = jnp.sum(num_p, axis=0) + jnp.float32(smooth)   # (N, C)
    den = jnp.sum(den_p, axis=0) + jnp.float32(smooth)   # (N, C)
    loss_nc = 1.0 - num / den                             # (N, C)
    return jnp.sum(jnp.mean(loss_nc, axis=0)) / C


def _dice_loss_ref(predict, target):
    # Pure-JAX reference mirroring the PyTorch module semantics.
    N, C, H, W = predict.shape
    p = jax.nn.softmax(predict.astype(jnp.float32), axis=1).reshape(N, C, -1)
    t = target.astype(jnp.float32).reshape(N, C, -1)
    total = jnp.float32(0.0)
    for i in range(C):
        num = jnp.sum(p[:, i] * t[:, i], axis=1) + 1.0
        den = jnp.sum(p[:, i] ** 2 + t[:, i] ** 2, axis=1) + 1.0
        total = total + jnp.mean(1.0 - num / den)
    return total / C


if __name__ == "__main__":
    key = jax.random.PRNGKey(0)
    ks = jax.random.split(key, 8)

    def make(kp, kl, N, C, H, W, dtype=jnp.float32):
        predict = jax.random.normal(kp, (N, C, H, W), dtype=jnp.float32).astype(dtype)
        labels = jax.random.randint(kl, (N, H, W), 0, C)
        target = jnp.transpose(jax.nn.one_hot(labels, C, dtype=dtype),
                               (0, 3, 1, 2))
        return predict, target

    # Test 1: tile-aligned S, 2-way split across halves, no masking.
    p1, t1 = make(ks[0], ks[1], 2, 4, 16, 16)
    out1 = jax.block_until_ready(dice_loss(p1, t1, tile_s=128))
    ref1 = _dice_loss_ref(p1, t1)
    assert jnp.allclose(out1, ref1, rtol=1e-5, atol=1e-5), (out1, ref1)

    # Test 2: ragged S (no wrapper pad; in-kernel lane-validity mask).
    p2, t2 = make(ks[2], ks[3], 2, 4, 12, 12)
    out2 = jax.block_until_ready(dice_loss(p2, t2))
    ref2 = _dice_loss_ref(p2, t2)
    assert jnp.allclose(out2, ref2, rtol=1e-5, atol=1e-5), (out2, ref2)

    # Test 3: odd block count -> second half gets a clamped duplicate block
    # that must be fully masked out.
    p3, t3 = make(ks[4], ks[5], 2, 4, 16, 24)
    out3 = jax.block_until_ready(dice_loss(p3, t3, tile_s=128))
    ref3 = _dice_loss_ref(p3, t3)
    assert jnp.allclose(out3, ref3, rtol=1e-5, atol=1e-5), (out3, ref3)

    # Test 4: bf16 inputs (in-kernel cast path, halved HBM traffic).
    p4, t4 = make(ks[6], ks[7], 2, 4, 16, 16, dtype=jnp.bfloat16)
    out4 = jax.block_until_ready(dice_loss(p4, t4, tile_s=128))
    ref4 = _dice_loss_ref(p4, t4)
    assert jnp.allclose(out4, ref4, rtol=1e-4, atol=1e-4), (out4, ref4)

    print("KERNEL_OK")
</pallas_src>

<mosaic_0001>
module attributes {stable_mosaic.version = 11 : i64} {
  func.func @_dice_kernel(%arg0: i32, %arg1: i32, %arg2: memref<2x4x128xf32, #tpu.memory_space<vmem>>, %arg3: memref<2x4x128xf32, #tpu.memory_space<vmem>>, %arg4: memref<1x2x4xf32, #tpu.memory_space<vmem>>, %arg5: memref<1x2x4xf32, #tpu.memory_space<vmem>>) attributes {dimension_semantics = [#tpu.dimension_semantics<parallel>, #tpu.dimension_semantics<arbitrary>], iteration_bounds = array<i64: 2, 1>, scalar_prefetch = 0 : i64, scratch_operands = 0 : i64, tpu.core_type = #tpu.core_type<tc>, window_params = [{transform_indices = @transform_0, window_bounds = array<i64: 2, 4, 128>}, {transform_indices = @transform_1, window_bounds = array<i64: 2, 4, 128>}, {transform_indices = @transform_2, window_bounds = array<i64: 1, 2, 4>}, {transform_indices = @transform_3, window_bounds = array<i64: 1, 2, 4>}]} {
    %c0_i32 = arith.constant 0 : i32
    %0 = arith.cmpi eq, %arg1, %c0_i32 : i32
    %1 = arith.extui %0 : i1 to i32
    %c0_i32_0 = arith.constant 0 : i32
    %2 = arith.cmpi ne, %1, %c0_i32_0 : i32
    scf.if %2 {
      %cst_22 = arith.constant 0.000000e+00 : f32
      %30 = vector.broadcast %cst_22 : f32 to vector<1x2x4xf32>
      %c0_23 = arith.constant 0 : index
      %c0_24 = arith.constant 0 : index
      %c0_25 = arith.constant 0 : index
      %31 = vector.load %arg4[%c0_23, %c0_24, %c0_25] : memref<1x2x4xf32, #tpu.memory_space<vmem>>, vector<1x2x4xf32>
      tpu.vector_store %arg4[%c0_23, %c0_24, %c0_25], %30 {strides = array<i32>} : memref<1x2x4xf32, #tpu.memory_space<vmem>>, vector<1x2x4xf32>,
      %cst_26 = arith.constant 0.000000e+00 : f32
      %32 = vector.broadcast %cst_26 : f32 to vector<1x2x4xf32>
      %c0_27 = arith.constant 0 : index
      %c0_28 = arith.constant 0 : index
      %c0_29 = arith.constant 0 : index
      %33 = vector.load %arg5[%c0_27, %c0_28, %c0_29] : memref<1x2x4xf32, #tpu.memory_space<vmem>>, vector<1x2x4xf32>
      tpu.vector_store %arg5[%c0_27, %c0_28, %c0_29], %32 {strides = array<i32>} : memref<1x2x4xf32, #tpu.memory_space<vmem>>, vector<1x2x4xf32>,
    } else {
    }
    %c0 = arith.constant 0 : index
    %c0_1 = arith.constant 0 : index
    %c0_2 = arith.constant 0 : index
    %3 = vector.load %arg2[%c0, %c0_1, %c0_2] : memref<2x4x128xf32, #tpu.memory_space<vmem>>, vector<2x4x128xf32>
    %c0_3 = arith.constant 0 : index
    %c0_4 = arith.constant 0 : index
    %c0_5 = arith.constant 0 : index
    %4 = vector.load %arg3[%c0_3, %c0_4, %c0_5] : memref<2x4x128xf32, #tpu.memory_space<vmem>>, vector<2x4x128xf32>
    %cst = arith.constant dense<0xFF800000> : vector<2x128xf32>
    %5 = vector.multi_reduction <maximumf>, %3, %cst [1] : vector<2x4x128xf32> to vector<2x128xf32>
    %6 = vector.shape_cast %5 : vector<2x128xf32> to vector<2x1x128xf32>
    %7 = vector.broadcast %6 : vector<2x1x128xf32> to vector<2x4x128xf32>
    %8 = arith.subf %3, %7 : vector<2x4x128xf32>
    %9 = math.exp %8 : vector<2x4x128xf32>
    %cst_6 = arith.constant dense<0.000000e+00> : vector<2x128xf32>
    %10 = vector.multi_reduction <add>, %9, %cst_6 [1] : vector<2x4x128xf32> to vector<2x128xf32>
    %11 = vector.shape_cast %10 : vector<2x128xf32> to vector<2x1x128xf32>
    %cst_7 = arith.constant 1.000000e+00 : f32
    %12 = vector.broadcast %cst_7 : f32 to vector<2x1x128xf32>
    %13 = arith.divf %12, %11 : vector<2x1x128xf32>
    %14 = vector.broadcast %13 : vector<2x1x128xf32> to vector<2x4x128xf32>
    %15 = arith.mulf %9, %14 : vector<2x4x128xf32>
    %c0_8 = arith.constant 0 : index
    %c0_9 = arith.constant 0 : index
    %c0_10 = arith.constant 0 : index
    %16 = vector.load %arg4[%c0_8, %c0_9, %c0_10] : memref<1x2x4xf32, #tpu.memory_space<vmem>>, vector<1x2x4xf32>
    %17 = arith.mulf %15, %4 : vector<2x4x128xf32>
    %cst_11 = arith.constant dense<0.000000e+00> : vector<2x4xf32>
    %18 = vector.multi_reduction <add>, %17, %cst_11 [2] : vector<2x4x128xf32> to vector<2x4xf32>
    %19 = vector.shape_cast %18 : vector<2x4xf32> to vector<1x2x4xf32>
    %20 = arith.addf %16, %19 : vector<1x2x4xf32>
    %c0_12 = arith.constant 0 : index
    %c0_13 = arith.constant 0 : index
    %c0_14 = arith.constant 0 : index
    %21 = vector.load %arg4[%c0_12, %c0_13, %c0_14] : memref<1x2x4xf32, #tpu.memory_space<vmem>>, vector<1x2x4xf32>
    tpu.vector_store %arg4[%c0_12, %c0_13, %c0_14], %20 {strides = array<i32>} : memref<1x2x4xf32, #tpu.memory_space<vmem>>, vector<1x2x4xf32>,
    %c0_15 = arith.constant 0 : index
    %c0_16 = arith.constant 0 : index
    %c0_17 = arith.constant 0 : index
    %22 = vector.load %arg5[%c0_15, %c0_16, %c0_17] : memref<1x2x4xf32, #tpu.memory_space<vmem>>, vector<1x2x4xf32>
    %23 = arith.mulf %15, %15 : vector<2x4x128xf32>
    %24 = arith.mulf %4, %4 : vector<2x4x128xf32>
    %25 = arith.addf %23, %24 : vector<2x4x128xf32>
    %cst_18 = arith.constant dense<0.000000e+00> : vector<2x4xf32>
    %26 = vector.multi_reduction <add>, %25, %cst_18 [2] : vector<2x4x128xf32> to vector<2x4xf32>
    %27 = vector.shape_cast %26 : vector<2x4xf32> to vector<1x2x4xf32>
    %28 = arith.addf %22, %27 : vector<1x2x4xf32>
    %c0_19 = arith.constant 0 : index
    %c0_20 = arith.constant 0 : index
    %c0_21 = arith.constant 0 : index
    %29 = vector.load %arg5[%c0_19, %c0_20, %c0_21] : memref<1x2x4xf32, #tpu.memory_space<vmem>>, vector<1x2x4xf32>
    tpu.vector_store %arg5[%c0_19, %c0_20, %c0_21], %28 {strides = array<i32>} : memref<1x2x4xf32, #tpu.memory_space<vmem>>, vector<1x2x4xf32>,
    return
  }
  func.func @transform_0(%arg0: i32, %arg1: i32) -> (i32, i32, i32) {
    %c1_i32 = arith.constant 1 : i32
    %0 = arith.muli %arg0, %c1_i32 : i32
    %1 = arith.addi %0, %arg1 : i32
    %c1_i32_0 = arith.constant 1 : i32
    %2 = arith.minsi %1, %c1_i32_0 : i32
    %c0_i32 = arith.constant 0 : i32
    %c0_i32_1 = arith.constant 0 : i32
    %c0_i32_2 = arith.constant 0 : i32
    return %c0_i32, %c0_i32_1, %2 : i32, i32, i32
  }
  func.func @transform_1(%arg0: i32, %arg1: i32) -> (i32, i32, i32) {
    %c1_i32 = arith.constant 1 : i32
    %0 = arith.muli %arg0, %c1_i32 : i32
    %1 = arith.addi %0, %arg1 : i32
    %c1_i32_0 = arith.constant 1 : i32
    %2 = arith.minsi %1, %c1_i32_0 : i32
    %c0_i32 = arith.constant 0 : i32
    %c0_i32_1 = arith.constant 0 : i32
    %c0_i32_2 = arith.constant 0 : i32
    return %c0_i32, %c0_i32_1, %2 : i32, i32, i32
  }
  func.func @transform_2(%arg0: i32, %arg1: i32) -> (i32, i32, i32) {
    %c0_i32 = arith.constant 0 : i32
    %c0_i32_0 = arith.constant 0 : i32
    %c0_i32_1 = arith.constant 0 : i32
    return %arg0, %c0_i32, %c0_i32_0 : i32, i32, i32
  }
  func.func @transform_3(%arg0: i32, %arg1: i32) -> (i32, i32, i32) {
    %c0_i32 = arith.constant 0 : i32
    %c0_i32_0 = arith.constant 0 : i32
    %c0_i32_1 = arith.constant 0 : i32
    return %arg0, %c0_i32, %c0_i32_0 : i32, i32, i32
  }
}

</mosaic_0001>

<llo_original>
// kernel: tpu_custom_call.1
$region0: #{tpu_custom_call.1}
  #allocation0 [shape = 'u32[]', space=smem, size = 0x4, offset = 0x4, fixed_abs, tag = 'smem constant byte address 0x4 - core index']
  #allocation1 [shape = 'u32[144,128]{1,0:T(1,128)}', space=vmem, size = 0x12000, scoped, tag = 'internal scratch']
  %s0 = inlined_call_operand.hbm [shape: f32[2,4,256], index: 0, kind: input, shape index: {}]
  %s1 = inlined_call_operand.hbm [shape: f32[2,4,256], index: 1, kind: input, shape index: {}]
  %s2 = inlined_call_operand.hbm [shape: f32[2,2,4], index: 2, kind: output, shape index: {0}]
  %s3 = inlined_call_operand.hbm [shape: f32[2,2,4], index: 3, kind: output, shape index: {1}]
  %4 = xla_tuple %s2, %s3
  %s5 = sld [smem:[#allocation0]]
  $region61: #{tpu_custom_call.1} parent=0
    _
  %s7 = ssub.s32 1, %s5
  %s8 = scalar_select 0, %s7, %s5
  $region1: #{tpu_custom_call.1} parent=0
    #allocation2 [shape = 'u8[8192]{0}', space=vmem, size = 0x2000, scoped, tag = 'input window, operand 0']
    #allocation3 [shape = 's32[2]{0}', space=sflag, size = 0x8, scoped, tag = 'scoped memory for tpu_custom_call.1']
    #allocation4 [shape = 's32[2]{0}', space=sflag, size = 0x8, scoped, tag = 'scoped memory for tpu_custom_call.1']
    #allocation5 [shape = 'u8[8192]{0}', space=vmem, size = 0x2000, scoped, tag = 'input window, operand 1']
    #allocation6 [shape = 's32[2]{0}', space=sflag, size = 0x8, scoped, tag = 'scoped memory for tpu_custom_call.1']
    #allocation7 [shape = 'u8[2048]{0}', space=vmem, size = 0x800, scoped, tag = 'output window, operand 0']
    #allocation8 [shape = 'u8[2048]{0}', space=vmem, size = 0x800, scoped, tag = 'output window, operand 1']
    #allocation9 [shape = 's32[2]{0}', space=sflag, size = 0x8, scoped, tag = 'scoped memory for tpu_custom_call.1']
    %9 = vsyncpa [#allocation3], 0
    %s10 = scalar_lea.sflag [#allocation3], 1
    %11 = vsyncpa %s10, 0
    %12 = vsyncpa [#allocation6], 0
    %s13 = scalar_lea.sflag [#allocation6], 1
    %14 = vsyncpa %s13, 0
    %15 = vsyncpa [#allocation4], 0
    %s16 = scalar_lea.sflag [#allocation4], 1
    %17 = vsyncpa %s16, 0
    %18 = vsyncpa [#allocation9], 0
    %s19 = scalar_lea.sflag [#allocation9], 1
    %20 = vsyncpa %s19, 0
    loop: start=0, step=1, limit=4
    $region2: #{tpu_custom_call.1} parent=1 // loop_pre_header
      _
    $region3: #{tpu_custom_call.1} parent=1 // loop_header
      %s22 = sphi 0, %s26
      %p23 = scmp.ge.s32.totalorder %s22, 4
      %s29 = sphi 0, %s41
      %s30 = sphi 0, %s37
      %s31 = sphi 0, %s29
      %s32 = sphi 0, %s30
      %s33 = sphi 0, %s31
      %s34 = sphi 0, %s32
      %s50 = sphi 0, %s52
      %s53 = sphi 0, %s50
      %s54 = sphi 0, %s53
      %s70 = sphi 0, %s54
      %s82 = sphi 0, %s84
      %s85 = sphi 0, %s82
      %s86 = sphi 0, %s85
      %s102 = sphi 0, %s86
      %s108 = sphi 0, %s110
      %s111 = sphi 0, %s108
      %s112 = sphi 0, %s111
      %s128 = sphi 0, %s112
      %s134 = sphi 0, %s136
      %s137 = sphi 0, %s134
      %s138 = sphi 0, %s137
      %s154 = sphi 0, %s138
    $region4: #{tpu_custom_call.1} parent=1 // loop_header_branch
      %25 = sbr.rel (%p23) target = $region8
    $region5: #{tpu_custom_call.1} parent=1 // loop_body
      %s27 = ssub.s32 %s22, 1
      %s28 = ssub.s32 %s22, 2
      %s35 = sadd.s32 1, %s30
      %p36 = scmp.ge.s32.totalorder %s35, 1
      %s37 = scalar_select %p36, 0, %s35
      %s38 = sadd.s32 1, %s29
      %s39 = scalar_select %p36, %s38, %s29
      %p40 = scmp.ge.s32.totalorder %s39, 2
      %s41 = scalar_select %p40, 0, %s39
      %s42 = sadd.s32 %s29, %s30
      %p43 = scmp.lt.s32.totalorder %s42, 1
      %s44 = scalar_select %p43, %s42, 1
      %s45 = sadd.s32 %s41, %s37
      %p46 = scmp.lt.s32.totalorder %s45, 1
      %s47 = scalar_select %p46, %s45, 1
      %s48 = ssub.s32 %s44, %s47
      %p49 = scmp.eq.s32.totalorder %s48, 0
      %s51 = sadd.s32 %s50, 1
      %s52 = scalar_select %p49, %s50, %s51
      %p55 = pneg %p49
      %p56 = scmp.eq.s32.totalorder %s22, 1
      %p57 = por %p55, %p56
      %p58 = scmp.ne.s32.totalorder %s50, %s53
      %p59 = scmp.eq.s32.totalorder %s22, 0
      %p60 = por %p58, %p59
      %p61 = scmp.ne.s32.totalorder %s50, %s53
      %p62 = scmp.eq.s32.totalorder %s27, 1
      %p63 = por %p61, %p62
      %p64 = scmp.ne.s32.totalorder %s53, %s54
      %p65 = scmp.eq.s32.totalorder %s27, 0
      %p66 = por %p64, %p65
      %p67 = scmp.ne.s32.totalorder %s53, %s54
      %p68 = scmp.eq.s32.totalorder %s28, 1
      %p69 = por %p67, %p68
      %p71 = scmp.ne.s32.totalorder %s54, %s70
      %p72 = scmp.eq.s32.totalorder %s28, 0
      %p73 = por %p71, %p72
      %s74 = sadd.s32 %s29, %s30
      %p75 = scmp.lt.s32.totalorder %s74, 1
      %s76 = scalar_select %p75, %s74, 1
      %s77 = sadd.s32 %s41, %s37
      %p78 = scmp.lt.s32.totalorder %s77, 1
      %s79 = scalar_select %p78, %s77, 1
      %s80 = ssub.s32 %s76, %s79
      %p81 = scmp.eq.s32.totalorder %s80, 0
      %s83 = sadd.s32 %s82, 1
      %s84 = scalar_select %p81, %s82, %s83
      %p87 = pneg %p81
      %p88 = scmp.eq.s32.totalorder %s22, 1
      %p89 = por %p87, %p88
      %p90 = scmp.ne.s32.totalorder %s82, %s85
      %p91 = scmp.eq.s32.totalorder %s22, 0
      %p92 = por %p90, %p91
      %p93 = scmp.ne.s32.totalorder %s82, %s85
      %p94 = scmp.eq.s32.totalorder %s27, 1
      %p95 = por %p93, %p94
      %p96 = scmp.ne.s32.totalorder %s85, %s86
      %p97 = scmp.eq.s32.totalorder %s27, 0
      %p98 = por %p96, %p97
      %p99 = scmp.ne.s32.totalorder %s85, %s86
      %p100 = scmp.eq.s32.totalorder %s28, 1
      %p101 = por %p99, %p100
      %p103 = scmp.ne.s32.totalorder %s86, %s102
      %p104 = scmp.eq.s32.totalorder %s28, 0
      %p105 = por %p103, %p104
      %s106 = ssub.s32 %s29, %s41
      %p107 = scmp.eq.s32.totalorder %s106, 0
      %s109 = sadd.s32 %s108, 1
      %s110 = scalar_select %p107, %s108, %s109
      %p113 = pneg %p107
      %p114 = scmp.eq.s32.totalorder %s22, 1
      %p115 = por %p113, %p114
      %p116 = scmp.ne.s32.totalorder %s108, %s111
      %p117 = scmp.eq.s32.totalorder %s22, 0
      %p118 = por %p116, %p117
      %p119 = scmp.ne.s32.totalorder %s108, %s111
      %p120 = scmp.eq.s32.totalorder %s27, 1
      %p121 = por %p119, %p120
      %p122 = scmp.ne.s32.totalorder %s111, %s112
      %p123 = scmp.eq.s32.totalorder %s27, 0
      %p124 = por %p122, %p123
      %p125 = scmp.ne.s32.totalorder %s111, %s112
      %p126 = scmp.eq.s32.totalorder %s28, 1
      %p127 = por %p125, %p126
      %p129 = scmp.ne.s32.totalorder %s112, %s128
      %p130 = scmp.eq.s32.totalorder %s28, 0
      %p131 = por %p129, %p130
      %s132 = ssub.s32 %s29, %s41
      %p133 = scmp.eq.s32.totalorder %s132, 0
      %s135 = sadd.s32 %s134, 1
      %s136 = scalar_select %p133, %s134, %s135
      %p139 = pneg %p133
      %p140 = scmp.eq.s32.totalorder %s22, 1
      %p141 = por %p139, %p140
      %p142 = scmp.ne.s32.totalorder %s134, %s137
      %p143 = scmp.eq.s32.totalorder %s22, 0
      %p144 = por %p142, %p143
      %p145 = scmp.ne.s32.totalorder %s134, %s137
      %p146 = scmp.eq.s32.totalorder %s27, 1
      %p147 = por %p145, %p146
      %p148 = scmp.ne.s32.totalorder %s137, %s138
      %p149 = scmp.eq.s32.totalorder %s27, 0
      %p150 = por %p148, %p149
      %p151 = scmp.ne.s32.totalorder %s137, %s138
      %p152 = scmp.eq.s32.totalorder %s28, 1
      %p153 = por %p151, %p152
      %p155 = scmp.ne.s32.totalorder %s138, %s154
      %p156 = scmp.eq.s32.totalorder %s28, 0
      %p157 = por %p155, %p156
      %p158 = scmp.le.s32.totalorder 1, %s22
      %p159 = scmp.lt.s32.totalorder %s22, 3
      %p160 = pnand %p158, %p159
      %p161 = pneg %p160
      // Predicated region
      $region9: #{tpu_custom_call.1} parent=5 // pred_check
        _
      $region10: #{tpu_custom_call.1} parent=5 // pred_check_branch
        %163 = sbr.rel (%p160) target = $region12
      $region11: #{tpu_custom_call.1} parent=5 // pred_region
        %s164 = ssub.s32 %s22, 1
      $region12: #{tpu_custom_call.1} parent=5 // pred_fallthru
        _
      %p165 = scmp.lt.s32.totalorder %s22, 2
      // Predicated region
      $region13: #{tpu_custom_call.1} parent=5 // pred_check
        %p166 = pneg %p165
      $region14: #{tpu_custom_call.1} parent=5 // pred_check_branch
        %168 = sbr.rel (%p166) target = $region16
      $region15: #{tpu_custom_call.1} parent=5 // pred_region
        // Predicated region
        $region17: #{tpu_custom_call.1} parent=15 // pred_check
          %p169 = pneg %p60
        $region18: #{tpu_custom_call.1} parent=15 // pred_check_branch
          %171 = sbr.rel (%p169) target = $region20
        $region19: #{tpu_custom_call.1} parent=15 // pred_region
          %s172 = sand.u32 %s50, 1
          %s173 = scalar_lea.sflag [#allocation3], %s172
          %s174 = sand.u32 %s50, 1
          %s175 = smul.addr %s174, 8
          %s176 = scalar_lea.vmem [#allocation2], %s175
          %s177 = sadd.s32 %s29, %s30
          %p178 = scmp.lt.s32.totalorder %s177, 1
          %s179 = scalar_select %p178, %s177, 1
          %s181 = ssub.s32 128, 128
          %182 = vsyncadd %s173, %s181
          %s183 = smul.addr %s179, 64
          %s184 = scalar_lea.hbm %s0, %s183
          %s185 = sshll.u32 %s176, 4
          %s186 = int_to_ptr.vmem [resolvable:$true] %s185
          %191 = dma.hbm_to_vmem [thread:$0]  %s184, 128, %s186, %s173, 128, 64, 4
        $region20: #{tpu_custom_call.1} parent=15 // pred_fallthru
          _
        // Predicated region
        $region21: #{tpu_custom_call.1} parent=15 // pred_check
          %p192 = pneg %p92
        $region22: #{tpu_custom_call.1} parent=15 // pred_check_branch
          %194 = sbr.rel (%p192) target = $region24
        $region23: #{tpu_custom_call.1} parent=15 // pred_region
          %s195 = sand.u32 %s82, 1
          %s196 = scalar_lea.sflag [#allocation6], %s195
          %s197 = sand.u32 %s82, 1
          %s198 = smul.addr %s197, 8
          %s199 = scalar_lea.vmem [#allocation5], %s198
          %s200 = sadd.s32 %s29, %s30
          %p201 = scmp.lt.s32.totalorder %s200, 1
          %s202 = scalar_select %p201, %s200, 1
          %s204 = ssub.s32 128, 128
          %205 = vsyncadd %s196, %s204
          %s206 = smul.addr %s202, 64
          %s207 = scalar_lea.hbm %s1, %s206
          %s208 = sshll.u32 %s199, 4
          %s209 = int_to_ptr.vmem [resolvable:$true] %s208
          %214 = dma.hbm_to_vmem [thread:$0]  %s207, 128, %s209, %s196, 128, 64, 4
        $region24: #{tpu_custom_call.1} parent=15 // pred_fallthru
          _
      $region16: #{tpu_custom_call.1} parent=5 // pred_fallthru
        _
      %p215 = scmp.le.s32.totalorder 1, %s22
      %p216 = scmp.lt.s32.totalorder %s22, 3
      %p217 = pnand %p215, %p216
      %p218 = pneg %p217
      // Predicated region
      $region25: #{tpu_custom_call.1} parent=5 // pred_check
        _
      $region26: #{tpu_custom_call.1} parent=5 // pred_check_branch
        %220 = sbr.rel (%p217) target = $region28
      $region27: #{tpu_custom_call.1} parent=5 // pred_region
        %s221 = ssub.s32 %s22, 1
        %s222 = sand.u32 %s53, 1
        %s223 = scalar_lea.sflag [#allocation3], %s222
        %s224 = sand.u32 %s53, 1
        %s225 = smul.addr %s224, 8
        %s226 = scalar_lea.vmem [#allocation2], %s225
        // Predicated region
        $region29: #{tpu_custom_call.1} parent=27 // pred_check
          %p227 = pneg %p66
        $region30: #{tpu_custom_call.1} parent=27 // pred_check_branch
          %229 = sbr.rel (%p227) target = $region32
        $region31: #{tpu_custom_call.1} parent=27 // pred_region
          %230 = dma.done %s223, 128
        $region32: #{tpu_custom_call.1} parent=27 // pred_fallthru
          _
        %s231 = sand.u32 %s85, 1
        %s232 = scalar_lea.sflag [#allocation6], %s231
        %s233 = sand.u32 %s85, 1
        %s234 = smul.addr %s233, 8
        %s235 = scalar_lea.vmem [#allocation5], %s234
        // Predicated region
        $region33: #{tpu_custom_call.1} parent=27 // pred_check
          %p236 = pneg %p98
        $region34: #{tpu_custom_call.1} parent=27 // pred_check_branch
          %238 = sbr.rel (%p236) target = $region36
        $region35: #{tpu_custom_call.1} parent=27 // pred_region
          %239 = dma.done %s232, 128
        $region36: #{tpu_custom_call.1} parent=27 // pred_fallthru
          _
        %s240 = sand.u32 %s53, 1
        %s241 = scalar_lea.sflag [#allocation3], %s240
        %s242 = sand.u32 %s53, 1
        %s243 = smul.addr %s242, 8
        %s244 = scalar_lea.vmem [#allocation2], %s243
        %p245 = pneg %p66
        %p246 = pneg %p63
        %s247 = sand.u32 %s85, 1
        %s248 = scalar_lea.sflag [#allocation6], %s247
        %s249 = sand.u32 %s85, 1
        %s250 = smul.addr %s249, 8
        %s251 = scalar_lea.vmem [#allocation5], %s250
        %p252 = pneg %p98
        %p253 = pneg %p95
        %p254 = pneg %p124
        %p255 = pneg %p121
        %s256 = sand.u32 %s111, 1
        %s257 = scalar_lea.sflag [#allocation4], %s256
        %s258 = sand.u32 %s111, 1
        %s259 = smul.addr %s258, 2
        %s260 = scalar_lea.vmem [#allocation7], %s259
        %p261 = pneg %p150
        %p262 = pneg %p147
        %s263 = sand.u32 %s137, 1
        %s264 = scalar_lea.sflag [#allocation9], %s263
        %s265 = sand.u32 %s137, 1
        %s266 = smul.addr %s265, 2
        %s267 = scalar_lea.vmem [#allocation8], %s266
        %s268 = sadd.s32 %s31, %s32
        %p269 = scmp.lt.s32.totalorder %s268, 1
        %s270 = scalar_select %p269, %s268, 1
        %s271 = sadd.s32 %s31, %s32
        %p272 = scmp.lt.s32.totalorder %s271, 1
        %s273 = scalar_select %p272, %s271, 1
        %p274 = scmp.eq.s32.totalorder %s32, 0
        // Predicated region
        $region37: #{tpu_custom_call.1} parent=27 // pred_check
          %p275 = pneg %p274
        $region38: #{tpu_custom_call.1} parent=27 // pred_check_branch
          %277 = sbr.rel (%p275) target = $region40
        $region39: #{tpu_custom_call.1} parent=27 // pred_region
          %vm278 = vcmask 25600
          %279 = vst.msk [vmem:[%s260] sm:$0x3] %vm278, 0.0
          %280 = vst.msk [vmem:[%s267] sm:$0x3] %vm278, 0.0
        $region40: #{tpu_custom_call.1} parent=27 // pred_fallthru
          _
        %v281 = vld [vmem:[%s226] sm:$0xf]
        %v282 = vld [vmem:[%s226 + $0x4] sm:$0xf]
        %v283 = vld [vmem:[%s235] sm:$0xf]
        %v284 = vld [vmem:[%s235 + $0x4] sm:$0xf]
        %vm285 = vcmask 1043456
        %v286 = vsel %vm285, %v281, -inf
        %v287 = vrot.slane %v286, 4
        %v288 = vmax.f32 %v286, %v287
        %v289 = vrot.slane %v288, 2
        %v290 = vmax.f32 %v288, %v289
        %v291 = vrot.slane %v290, 1
        %v292 = vmax.f32 %v290, %v291
        %v293 = vsel %vm285, %v282, -inf
        %v294 = vrot.slane %v293, 4
        %v295 = vmax.f32 %v293, %v294
        %v296 = vrot.slane %v295, 2
        %v297 = vmax.f32 %v295, %v296
        %v298 = vrot.slane %v297, 1
        %v299 = vmax.f32 %v297, %v298
        %v300 = vsub.f32 %v281, %v292
        %v301 = vsub.f32 %v282, %v299
        %v302 = vmul.f32 %v300, 1.442695
        %v303 = vpow.pop %v302
        %v304 = vmul.f32 %v301, 1.442695
        %v305 = vpow.pop %v304
        %v306 = vsel %vm285, %v303, 0.0
        %v307 = vrot.slane %v306, 4
        %v308 = vadd.f32 %v306, %v307
        %v309 = vrot.slane %v308, 2
        %v310 = vadd.f32 %v308, %v309
        %v311 = vrot.slane %v310, 1
        %v312 = vadd.f32 %v310, %v311
        %v313 = vsel %vm285, %v305, 0.0
        %v314 = vrot.slane %v313, 4
        %v315 = vadd.f32 %v313, %v314
        %v316 = vrot.slane %v315, 2
        %v317 = vadd.f32 %v315, %v316
        %v318 = vrot.slane %v317, 1
        %v319 = vadd.f32 %v317, %v318
        %v320 = vrcp.pop %v312
        %v321 = vmul.f32 1.0, %v320
        %v322 = vrcp.pop %v319
        %v323 = vmul.f32 1.0, %v322
        %v324 = vmul.f32 %v303, %v321
        %v325 = vmul.f32 %v305, %v323
        %v326 = vld [vmem:[%s260] sm:$0x3]
        %v327 = vmul.f32 %v324, %v283
        %v328 = vmul.f32 %v325, %v284
        %v329 = vsel %vm285, %v327, 0.0
        %330 = vadd.xlane.f32.xlu0 %v329
        %v331 = vpop.xlane.xlu0 %330
        %v332 = vsel %vm285, %v328, 0.0
        %333 = vadd.xlane.f32.xlu0 %v332
        %v334 = vpop.xlane.xlu0 %333
        %v337 = vlaneseq
        %v338 = vand.u32 %v337, 127
        %v339 = vlaneseq
        %v340 = vshrl.u32 %v339, 7
        %v341 = vsub.s32 %v338, %v340
        %v342 = vrot.slane %v331, %v341
        %v343 = vlaneseq
        %v344 = vshrl.u32 %v343, 7
        %v345 = vsub.s32 %v338, %v344
        %v346 = vrot.slane %v334, %v345
        %vm347 = vcmask 1041409
        %v348 = vsel %vm347, %v346, %v342
        %v350 = vadd.f32 %v326, %v348
        %vm351 = vcmask 25600
        %352 = vst.msk [vmem:[%s260] sm:$0x3] %vm351, %v350
        %v353 = vld [vmem:[%s267] sm:$0x3]
        %v354 = vmul.f32 %v324, %v324
        %v355 = vmul.f32 %v325, %v325
        %v356 = vmul.f32 %v283, %v283
        %v357 = vmul.f32 %v284, %v284
        %v358 = vadd.f32 %v354, %v356
        %v359 = vadd.f32 %v355, %v357
        %v360 = vsel %vm285, %v358, 0.0
        %361 = vadd.xlane.f32.xlu0 %v360
        %v362 = vpop.xlane.xlu0 %361
        %v363 = vsel %vm285, %v359, 0.0
        %364 = vadd.xlane.f32.xlu0 %v363
        %v365 = vpop.xlane.xlu0 %364
        %v368 = vlaneseq
        %v369 = vshrl.u32 %v368, 7
        %v370 = vsub.s32 %v338, %v369
        %v371 = vrot.slane %v362, %v370
        %v372 = vlaneseq
        %v373 = vshrl.u32 %v372, 7
        %v374 = vsub.s32 %v338, %v373
        %v375 = vrot.slane %v365, %v374
        %v376 = vsel %vm347, %v375, %v371
        %v378 = vadd.f32 %v353, %v376
        %379 = vst.msk [vmem:[%s267] sm:$0x3] %vm351, %v378
        %s380 = sand.u32 %s111, 1
        %s381 = scalar_lea.sflag [#allocation4], %s380
        %s382 = sand.u32 %s111, 1
        %s383 = smul.addr %s382, 2
        %s384 = scalar_lea.vmem [#allocation7], %s383
        %s385 = sand.u32 %s137, 1
        %s386 = scalar_lea.sflag [#allocation9], %s385
        %s387 = sand.u32 %s137, 1
        %s388 = smul.addr %s387, 2
        %s389 = scalar_lea.vmem [#allocation8], %s388
        // Predicated region
        $region41: #{tpu_custom_call.1} parent=27 // pred_check
          %p390 = pneg %p121
        $region42: #{tpu_custom_call.1} parent=27 // pred_check_branch
          %392 = sbr.rel (%p390) target = $region44
        $region43: #{tpu_custom_call.1} parent=27 // pred_region
          %s394 = ssub.s32 32, 32
          %395 = vsyncadd %s381, %s394
          %s396 = smul.addr %s31, 32
          %s397 = scalar_lea.hbm %s2, %s396
          %s399 = sshll.u32 %s384, 4
          %s400 = int_to_ptr.vmem [resolvable:$true] %s399
          %402 = dma.vmem_to_hbm [thread:$0]  %s400, 32, %s397, %s381
        $region44: #{tpu_custom_call.1} parent=27 // pred_fallthru
          _
        // Predicated region
        $region45: #{tpu_custom_call.1} parent=27 // pred_check
          %p403 = pneg %p147
        $region46: #{tpu_custom_call.1} parent=27 // pred_check_branch
          %405 = sbr.rel (%p403) target = $region48
        $region47: #{tpu_custom_call.1} parent=27 // pred_region
          %s407 = ssub.s32 32, 32
          %408 = vsyncadd %s386, %s407
          %s409 = smul.addr %s31, 32
          %s410 = scalar_lea.hbm %s3, %s409
          %s412 = sshll.u32 %s389, 4
          %s413 = int_to_ptr.vmem [resolvable:$true] %s412
          %415 = dma.vmem_to_hbm [thread:$0]  %s413, 32, %s410, %s386
        $region48: #{tpu_custom_call.1} parent=27 // pred_fallthru
          _
      $region28: #{tpu_custom_call.1} parent=5 // pred_fallthru
        _
      %p416 = scmp.le.s32.totalorder 2, %s22
      // Predicated region
      $region49: #{tpu_custom_call.1} parent=5 // pred_check
        %p417 = pneg %p416
      $region50: #{tpu_custom_call.1} parent=5 // pred_check_branch
        %419 = sbr.rel (%p417) target = $region52
      $region51: #{tpu_custom_call.1} parent=5 // pred_region
        %s420 = ssub.s32 %s22, 2
        // Predicated region
        $region53: #{tpu_custom_call.1} parent=51 // pred_check
          %p421 = pneg %p127
        $region54: #{tpu_custom_call.1} parent=51 // pred_check_branch
          %423 = sbr.rel (%p421) target = $region56
        $region55: #{tpu_custom_call.1} parent=51 // pred_region
          %s424 = sand.u32 %s112, 1
          %s425 = scalar_lea.sflag [#allocation4], %s424
          %s426 = sand.u32 %s112, 1
          %s427 = smul.addr %s426, 2
          %s428 = scalar_lea.vmem [#allocation7], %s427
          %429 = dma.done %s425, 32
        $region56: #{tpu_custom_call.1} parent=51 // pred_fallthru
          _
        // Predicated region
        $region57: #{tpu_custom_call.1} parent=51 // pred_check
          %p430 = pneg %p153
        $region58: #{tpu_custom_call.1} parent=51 // pred_check_branch
          %432 = sbr.rel (%p430) target = $region60
        $region59: #{tpu_custom_call.1} parent=51 // pred_region
          %s433 = sand.u32 %s138, 1
          %s434 = scalar_lea.sflag [#allocation9], %s433
          %s435 = sand.u32 %s138, 1
          %s436 = smul.addr %s435, 2
          %s437 = scalar_lea.vmem [#allocation8], %s436
          %438 = dma.done %s434, 32
        $region60: #{tpu_custom_call.1} parent=51 // pred_fallthru
          _
      $region52: #{tpu_custom_call.1} parent=5 // pred_fallthru
        _
    $region6: #{tpu_custom_call.1} parent=1 // loop_footer
      %s26 = sadd.s32 1, %s22
    $region7: #{tpu_custom_call.1} parent=1 // loop_footer_branch
      %21 = sbr.rel target = $region3
    $region8: #{tpu_custom_call.1} parent=1 // loop_exit
      _
    %439 = vsyncpa [#allocation3], 1
    %s440 = scalar_lea.sflag [#allocation3], 1
    %441 = vsyncpa %s440, 1
    %442 = vsyncpa [#allocation6], 1
    %s443 = scalar_lea.sflag [#allocation6], 1
    %444 = vsyncpa %s443, 1
    %445 = vsyncpa [#allocation4], 1
    %s446 = scalar_lea.sflag [#allocation4], 1
    %447 = vsyncpa %s446, 1
    %448 = vsyncpa [#allocation9], 1
    %s449 = scalar_lea.sflag [#allocation9], 1
    %450 = vsyncpa %s449, 1

</llo_original>
